<compile_context>
chip_gen: v6e
topology: v6e:2x2x1
jax: 0.10.0
libtpu: 0.0.40
codegen_flags: <defaults>
</compile_context>

<pallas_src>
import functools

import jax
import jax.numpy as jnp
from jax.experimental import pallas as pl
from jax.experimental.pallas import tpu as pltpu


def _round_up(n: int, m: int) -> int:
    return (n + m - 1) // m * m


_SMALL_BATCH = 128  # grid-less single-invocation path below this many rows


def mlp_kernel(x_ref, w1_ref, b1_ref, w2_ref, b2_ref, out_ref):
    w1 = w1_ref[...]
    # Cast activations to the weight dtype (bf16 by default): MXU runs
    # bf16 x bf16 -> f32; biases and accumulation stay f32.
    x = x_ref[...].astype(w1.dtype)
    h = jnp.dot(x, w1, preferred_element_type=jnp.float32)          # fc1
    h = jnp.maximum(h + b1_ref[...], 0.0)                           # ReLU
    y = jnp.dot(h.astype(w2_ref.dtype), w2_ref[...],                # fc2
                preferred_element_type=jnp.float32)
    out_ref[...] = (y + b2_ref[...]).astype(out_ref.dtype)


def _vmem_limit_bytes(rows, in_size, hidden, n_classes, w_bytes):
    # Generous estimate: double-buffered x/out tiles + resident weights +
    # lane-padded intermediates; clamp to [8 MiB, 64 MiB] (valid on v5e..v7x).
    act = rows * max(in_size, 128) * 4
    outb = rows * max(_round_up(n_classes, 128), 128) * 4
    hid = rows * max(_round_up(hidden, 128), 128) * 4
    need = 2 * w_bytes + 2 * act + 2 * outb + 2 * hid + (2 << 20)
    return int(min(max(need, 8 << 20), 64 << 20))


@functools.partial(jax.jit, static_argnames=("tile_m",))
def graph_classification_forward(x, w1, b1, w2, b2, *, tile_m=512):
    """logits = relu(x @ w1 + b1) @ w2 + b2   (torch math: x @ W.T + b).

    x : [B, input_size]                 f32 (or bf16)
    w1: [input_size, hidden]            from prepare_params (bf16 by default)
    b1: [1, hidden]                     f32
    w2: [hidden, n_classes]             from prepare_params
    b2: [1, n_classes]                  f32
    returns f32 logits [B, n_classes]
    """
    B, in_size = x.shape
    hidden = w1.shape[1]
    n_classes = w2.shape[1]
    b1 = b1.reshape(1, hidden)
    b2 = b2.reshape(1, n_classes)

    w_bytes = sum(int(a.size) * a.dtype.itemsize for a in (w1, b1, w2, b2))
    cost = pl.CostEstimate(
        flops=2 * B * (in_size * hidden + hidden * n_classes),
        transcendentals=0,
        bytes_accessed=int(x.size) * x.dtype.itemsize + w_bytes + B * n_classes * 4,
    )

    if B <= _SMALL_BATCH:
        # Small batch: grid-less call, every operand VMEM-resident, no pipeline
        # prologue/epilogue. Unaligned shapes are fine (full-array blocks).
        limit = _vmem_limit_bytes(max(B, 8), in_size, hidden, n_classes, w_bytes)
        return pl.pallas_call(
            mlp_kernel,
            out_shape=jax.ShapeDtypeStruct((B, n_classes), jnp.float32),
            in_specs=[pl.BlockSpec(memory_space=pltpu.MemorySpace.VMEM)] * 5,
            out_specs=pl.BlockSpec(memory_space=pltpu.MemorySpace.VMEM),
            compiler_params=pltpu.CompilerParams(vmem_limit_bytes=limit),
            cost_estimate=cost,
        )(x, w1, b1, w2, b2)

    # Large batch: tile the batch axis. Keep >=2 tiles so both v7x TensorCores
    # get work under "parallel" semantics; cap the tile at tile_m (512 default,
    # ~85% of HBM roofline per the measured tile-size sweep).
    tm = max(128, min(tile_m, _round_up(-(-B // 2), 128)))
    b_t = _round_up(B, tm)
    # Single row-only pad of x (no feature-dim pad, no double pad).
    xp = jnp.pad(x, ((0, b_t - B), (0, 0))) if b_t != B else x

    limit = _vmem_limit_bytes(tm, in_size, hidden, n_classes, w_bytes)
    out = pl.pallas_call(
        mlp_kernel,
        out_shape=jax.ShapeDtypeStruct((b_t, n_classes), jnp.float32),
        grid=(b_t // tm,),
        in_specs=[
            pl.BlockSpec((tm, in_size), lambda i: (i, 0)),       # x tile
            pl.BlockSpec((in_size, hidden), lambda i: (0, 0)),   # w1 (resident)
            pl.BlockSpec((1, hidden), lambda i: (0, 0)),         # b1
            pl.BlockSpec((hidden, n_classes), lambda i: (0, 0)),  # w2 (resident)
            pl.BlockSpec((1, n_classes), lambda i: (0, 0)),      # b2
        ],
        out_specs=pl.BlockSpec((tm, n_classes), lambda i: (i, 0)),
        compiler_params=pltpu.CompilerParams(
            dimension_semantics=("parallel",),
            vmem_limit_bytes=limit),
        cost_estimate=cost,
    )(xp, w1, b1, w2, b2)
    return out[:B] if b_t != B else out


def prepare_params(w1, b1, w2, b2, *, use_bf16=True):
    """One-time parameter prep (call ONCE, not per step).

    Weights are stored [in, out] (transposed vs. torch.nn.Linear.weight) and
    cast to bf16 by default so every forward reads half the weight bytes from
    HBM; biases stay f32 (added onto the f32 MXU accumulator).
    """
    wdt = jnp.bfloat16 if use_bf16 else jnp.float32
    return (jnp.asarray(w1, wdt),
            jnp.asarray(b1, jnp.float32).reshape(1, -1),
            jnp.asarray(w2, wdt),
            jnp.asarray(b2, jnp.float32).reshape(1, -1))


def init_params(key, input_size, hidden, n_classes):
    """Deterministic init mirroring nn.Linear's U(-1/sqrt(fan_in), +1/sqrt(fan_in))."""
    k1, k2, k3, k4 = jax.random.split(key, 4)
    bound1 = 1.0 / jnp.sqrt(input_size)
    bound2 = 1.0 / jnp.sqrt(hidden)
    w1 = jax.random.uniform(k1, (input_size, hidden), jnp.float32, -bound1, bound1)
    b1 = jax.random.uniform(k2, (1, hidden), jnp.float32, -bound1, bound1)
    w2 = jax.random.uniform(k3, (hidden, n_classes), jnp.float32, -bound2, bound2)
    b2 = jax.random.uniform(k4, (1, n_classes), jnp.float32, -bound2, bound2)
    return w1, b1, w2, b2


if __name__ == "__main__":
    input_size, hidden, n_classes = 64, 32, 10
    batch = 8

    key = jax.random.PRNGKey(0)
    kx, kp = jax.random.split(key)
    x = jax.random.normal(kx, (batch, input_size), jnp.float32)
    w1, b1, w2, b2 = init_params(kp, input_size, hidden, n_classes)
    ref = jnp.maximum(x @ w1 + b1, 0.0) @ w2 + b2

    # f32-weight path: strict tolerance (same math, zero-padding-free).
    p32 = prepare_params(w1, b1, w2, b2, use_bf16=False)
    out32 = jax.block_until_ready(graph_classification_forward(x, *p32))
    assert out32.shape == (batch, n_classes)
    assert jnp.allclose(out32, ref, atol=1e-5, rtol=1e-5), float(
        jnp.max(jnp.abs(out32 - ref)))

    # Default bf16-weight path (f32 accumulation): loose tolerance vs f32 ref.
    pbf = prepare_params(w1, b1, w2, b2)  # use_bf16=True
    outbf = jax.block_until_ready(graph_classification_forward(x, *pbf))
    assert jnp.allclose(outbf, ref, atol=5e-2, rtol=5e-2), float(
        jnp.max(jnp.abs(outbf - ref)))

    # Batch-tiled path (grid of >=2 "parallel" tiles): f32 strict + bf16 loose.
    xb = jax.random.normal(kx, (512, input_size), jnp.float32)
    refb = jnp.maximum(xb @ w1 + b1, 0.0) @ w2 + b2
    outb32 = jax.block_until_ready(graph_classification_forward(xb, *p32))
    assert jnp.allclose(outb32, refb, atol=1e-5, rtol=1e-5)
    outbbf = jax.block_until_ready(graph_classification_forward(xb, *pbf))
    assert jnp.allclose(outbbf, refb, atol=5e-2, rtol=5e-2)

    print("KERNEL_OK")
</pallas_src>

<mosaic_0001>
module attributes {stable_mosaic.version = 11 : i64} {
  func.func @mlp_kernel(%arg0: memref<8x64xf32, #tpu.memory_space<vmem>>, %arg1: memref<64x32xf32, #tpu.memory_space<vmem>>, %arg2: memref<1x32xf32, #tpu.memory_space<vmem>>, %arg3: memref<32x10xf32, #tpu.memory_space<vmem>>, %arg4: memref<1x10xf32, #tpu.memory_space<vmem>>, %arg5: memref<8x10xf32, #tpu.memory_space<vmem>>) attributes {dimension_semantics = [], scalar_prefetch = 0 : i64, scratch_operands = 0 : i64, tpu.core_type = #tpu.core_type<tc>} {
    %c0 = arith.constant 0 : index
    %c0_0 = arith.constant 0 : index
    %0 = vector.load %arg1[%c0, %c0_0] : memref<64x32xf32, #tpu.memory_space<vmem>>, vector<64x32xf32>
    %c0_1 = arith.constant 0 : index
    %c0_2 = arith.constant 0 : index
    %1 = vector.load %arg0[%c0_1, %c0_2] : memref<8x64xf32, #tpu.memory_space<vmem>>, vector<8x64xf32>
    %cst = arith.constant dense<0.000000e+00> : vector<8x32xf32>
    %2 = tpu.matmul %1, %0, %cst {dimension_numbers = #tpu.dot_dimension_numbers<[1], [0], [0], [1], [0, 0, 1, 1], [], []>} : vector<8x64xf32>, vector<64x32xf32>, vector<8x32xf32> -> vector<8x32xf32>
    %c0_3 = arith.constant 0 : index
    %c0_4 = arith.constant 0 : index
    %3 = vector.load %arg2[%c0_3, %c0_4] : memref<1x32xf32, #tpu.memory_space<vmem>>, vector<1x32xf32>
    %4 = vector.broadcast %3 : vector<1x32xf32> to vector<8x32xf32>
    %5 = arith.addf %2, %4 : vector<8x32xf32>
    %cst_5 = arith.constant 0.000000e+00 : f32
    %6 = vector.broadcast %cst_5 : f32 to vector<8x32xf32>
    %7 = arith.maximumf %5, %6 : vector<8x32xf32>
    %c0_6 = arith.constant 0 : index
    %c0_7 = arith.constant 0 : index
    %8 = vector.load %arg3[%c0_6, %c0_7] : memref<32x10xf32, #tpu.memory_space<vmem>>, vector<32x10xf32>
    %cst_8 = arith.constant dense<0.000000e+00> : vector<8x10xf32>
    %9 = tpu.matmul %7, %8, %cst_8 {dimension_numbers = #tpu.dot_dimension_numbers<[1], [0], [0], [1], [0, 0, 1, 1], [], []>} : vector<8x32xf32>, vector<32x10xf32>, vector<8x10xf32> -> vector<8x10xf32>
    %c0_9 = arith.constant 0 : index
    %c0_10 = arith.constant 0 : index
    %10 = vector.load %arg4[%c0_9, %c0_10] : memref<1x10xf32, #tpu.memory_space<vmem>>, vector<1x10xf32>
    %11 = vector.broadcast %10 : vector<1x10xf32> to vector<8x10xf32>
    %12 = arith.addf %9, %11 : vector<8x10xf32>
    %c0_11 = arith.constant 0 : index
    %c0_12 = arith.constant 0 : index
    %13 = vector.load %arg5[%c0_11, %c0_12] : memref<8x10xf32, #tpu.memory_space<vmem>>, vector<8x10xf32>
    tpu.vector_store %arg5[%c0_11, %c0_12], %12 {strides = array<i32>} : memref<8x10xf32, #tpu.memory_space<vmem>>, vector<8x10xf32>,
    return
  }
}

</mosaic_0001>

<llo_original>
// kernel: graph_classification_forward.1
$region0: #{graph_classification_forward.1}
  #allocation0 [shape = 'u32[]', space=smem, size = 0x4, offset = 0x4, fixed_abs, tag = 'smem constant byte address 0x4 - core index']
  #allocation1 [shape = 'u32[144,128]{1,0:T(1,128)}', space=vmem, size = 0x12000, scoped, tag = 'internal scratch']
  %s0 = inlined_call_operand.vmem [shape: f32[8,64], index: 0, kind: input, shape index: {}]
  %s1 = inlined_call_operand.vmem [shape: f32[64,32], index: 1, kind: input, shape index: {}]
  %s2 = inlined_call_operand.vmem [shape: f32[1,32], index: 2, kind: input, shape index: {}]
  %s3 = inlined_call_operand.vmem [shape: f32[32,10], index: 3, kind: input, shape index: {}]
  %s4 = inlined_call_operand.vmem [shape: f32[1,10], index: 4, kind: input, shape index: {}]
  %s5 = inlined_call_operand.hbm [shape: f32[8,10], index: 5, kind: output, shape index: {}]
  %s6 = sld [smem:[#allocation0]]
  $region30: #{graph_classification_forward.1} parent=0
    _
  %s8 = ssub.s32 1, %s6
  %s9 = scalar_select 0, %s8, %s6
  $region1: #{graph_classification_forward.1} parent=0
    #allocation2 [shape = 'u8[4096]{0}', space=vmem, size = 0x1000, scoped, tag = 'output window, operand 0, single buffered']
    #allocation3 [shape = 's32[1]{0}', space=sflag, size = 0x4, scoped, tag = 'scoped memory for graph_classification_forward.1']
    %10 = vsyncpa [#allocation3], 0
    // Predicated region
    $region2: #{graph_classification_forward.1} parent=1 // pred_check
      _
    $region3: #{graph_classification_forward.1} parent=1 // pred_check_branch
      %12 = sbr.rel (0) target = $region5
    $region4: #{graph_classification_forward.1} parent=1 // pred_region
      _
    $region5: #{graph_classification_forward.1} parent=1 // pred_fallthru
      _
    // Predicated region
    $region6: #{graph_classification_forward.1} parent=1 // pred_check
      _
    $region7: #{graph_classification_forward.1} parent=1 // pred_check_branch
      %14 = sbr.rel (0) target = $region9
    $region8: #{graph_classification_forward.1} parent=1 // pred_region
      _
    $region9: #{graph_classification_forward.1} parent=1 // pred_fallthru
      _
    // Predicated region
    $region10: #{graph_classification_forward.1} parent=1 // pred_check
      _
    $region11: #{graph_classification_forward.1} parent=1 // pred_check_branch
      %16 = sbr.rel (0) target = $region13
    $region12: #{graph_classification_forward.1} parent=1 // pred_region
      _
    $region13: #{graph_classification_forward.1} parent=1 // pred_fallthru
      _
    // Predicated region
    $region14: #{graph_classification_forward.1} parent=1 // pred_check
      _
    $region15: #{graph_classification_forward.1} parent=1 // pred_check_branch
      %18 = sbr.rel (0) target = $region17
    $region16: #{graph_classification_forward.1} parent=1 // pred_region
      _
    $region17: #{graph_classification_forward.1} parent=1 // pred_fallthru
      _
    // Predicated region
    $region18: #{graph_classification_forward.1} parent=1 // pred_check
      _
    $region19: #{graph_classification_forward.1} parent=1 // pred_check_branch
      %20 = sbr.rel (0) target = $region21
    $region20: #{graph_classification_forward.1} parent=1 // pred_region
      _
    $region21: #{graph_classification_forward.1} parent=1 // pred_fallthru
      _
    %v21 = vld [vmem:[%s1] sm:$0xff]
    %v22 = vld [vmem:[%s1 + $0x8] sm:$0xff]
    %v23 = vld [vmem:[%s1 + $0x10] sm:$0xff]
    %v24 = vld [vmem:[%s1 + $0x18] sm:$0xff]
    %v25 = vld [vmem:[%s1 + $0x20] sm:$0xff]
    %v26 = vld [vmem:[%s1 + $0x28] sm:$0xff]
    %v27 = vld [vmem:[%s1 + $0x30] sm:$0xff]
    %v28 = vld [vmem:[%s1 + $0x38] sm:$0xff]
    %v29 = vld [vmem:[%s0] sm:$0xff]
    %v30 = vld [vmem:[%s2] sm:$0x1]
    %v32 = vlaneseq
    %v33 = vshrl.u32 %v32, 7
    %v34 = vsub.s32 0, %v33
    %v35 = vrot.slane %v30, %v34
    %vm37 = vcmask 523264
    %v39 = vsel %vm37, %v29, 0
    %41 = vmatprep.subr.mxu0 0.0
    %42 = vmatpush1.msra.mxu0 0.0
    %43 = vmatprep.subr.mxu0 0.0
    %44 = vmatpush1.msra.mxu0 0.0
    %45 = vmatprep.subr.mxu0 0.0
    %46 = vmatpush1.msra.mxu0 0.0
    %47 = vmatprep.subr.mxu0 0.0
    %48 = vmatpush1.msra.mxu0 0.0
    %49 = vmatprep.subr.mxu0 0.0
    %50 = vmatpush1.msra.mxu0 0.0
    %51 = vmatprep.subr.mxu0 0.0
    %52 = vmatpush1.msra.mxu0 0.0
    %53 = vmatprep.subr.mxu0 0.0
    %54 = vmatpush1.msra.mxu0 0.0
    %55 = vmatprep.subr.mxu0 0.0
    %56 = vmatpush1.msra.mxu0 0.0
    %57 = vmatprep.subr.mxu0 0.0
    %58 = vmatpush1.msra.mxu0 %v28
    %59 = vmatprep.subr.mxu0 0.0
    %60 = vmatpush1.msra.mxu0 %v27
    %61 = vmatprep.subr.mxu0 0.0
    %62 = vmatpush1.msra.mxu0 %v26
    %63 = vmatprep.subr.mxu0 0.0
    %64 = vmatpush1.msra.mxu0 %v25
    %65 = vmatprep.subr.mxu0 0.0
    %66 = vmatpush1.msra.mxu0 %v24
    %67 = vmatprep.subr.mxu0 0.0
    %68 = vmatpush1.msra.mxu0 %v23
    %69 = vmatprep.subr.mxu0 0.0
    %70 = vmatpush1.msra.mxu0 %v22
    %71 = vmatprep.subr.mxu0 0.0
    %72 = vmatpush1.msra.mxu0 %v21
    %73 = vmatprep.subr.mxu0 0.0
    %74 = vmatpush2.msra.mxu0 0.0
    %75 = vmatprep.subr.mxu0 0.0
    %76 = vmatpush2.msra.mxu0 0.0
    %77 = vmatprep.subr.mxu0 0.0
    %78 = vmatpush2.msra.mxu0 0.0
    %79 = vmatprep.subr.mxu0 0.0
    %80 = vmatpush2.msra.mxu0 0.0
    %81 = vmatprep.subr.mxu0 0.0
    %82 = vmatpush2.msra.mxu0 0.0
    %83 = vmatprep.subr.mxu0 0.0
    %84 = vmatpush2.msra.mxu0 0.0
    %85 = vmatprep.subr.mxu0 0.0
    %86 = vmatpush2.msra.mxu0 0.0
    %87 = vmatprep.subr.mxu0 0.0
    %88 = vmatpush2.msra.mxu0 0.0
    %89 = vmatprep.subr.mxu0 0.0
    %90 = vmatpush2.msra.mxu0 0.0
    %91 = vmatprep.subr.mxu0 0.0
    %92 = vmatpush2.msra.mxu0 0.0
    %93 = vmatprep.subr.mxu0 0.0
    %94 = vmatpush2.msra.mxu0 0.0
    %95 = vmatprep.subr.mxu0 0.0
    %96 = vmatpush2.msra.mxu0 0.0
    %97 = vmatprep.subr.mxu0 0.0
    %98 = vmatpush2.msra.mxu0 0.0
    %99 = vmatprep.subr.mxu0 0.0
    %100 = vmatpush2.msra.mxu0 0.0
    %101 = vmatprep.subr.mxu0 0.0
    %102 = vmatpush2.msra.mxu0 0.0
    %103 = vmatprep.subr.mxu0 0.0
    %104 = vmatpush2.msra.mxu0 0.0
    %105 = vmatprep.mubr.f32.mxu0 0.0
    %106 = vmatmul.mubr.f32.gmra.mxu0 %v39
    %v107 = vpop.f32.mrf.mxu0
    %v108 = vadd.f32 %v35, %v107
    %v109 = vpop.f32.mrf.mxu0
    %110 = vdwg.mxu0
    %v111 = vmax.f32 %v108, 0.0
    %v112 = vld [vmem:[%s3] sm:$0xff]
    %v113 = vld [vmem:[%s3 + $0x8] sm:$0xff]
    %v114 = vld [vmem:[%s3 + $0x10] sm:$0xff]
    %v115 = vld [vmem:[%s3 + $0x18] sm:$0xff]
    %v116 = vld [vmem:[%s4] sm:$0x1]
    %v118 = vlaneseq
    %v119 = vshrl.u32 %v118, 7
    %v120 = vsub.s32 0, %v119
    %v121 = vrot.slane %v116, %v120
    %vm123 = vcmask 261120
    %v125 = vsel %vm123, %v111, 0
    %127 = vmatprep.subr.mxu0 0.0
    %128 = vmatpush1.msra.mxu0 0.0
    %129 = vmatprep.subr.mxu0 0.0
    %130 = vmatpush1.msra.mxu0 0.0
    %131 = vmatprep.subr.mxu0 0.0
    %132 = vmatpush1.msra.mxu0 0.0
    %133 = vmatprep.subr.mxu0 0.0
    %134 = vmatpush1.msra.mxu0 0.0
    %135 = vmatprep.subr.mxu0 0.0
    %136 = vmatpush1.msra.mxu0 0.0
    %137 = vmatprep.subr.mxu0 0.0
    %138 = vmatpush1.msra.mxu0 0.0
    %139 = vmatprep.subr.mxu0 0.0
    %140 = vmatpush1.msra.mxu0 0.0
    %141 = vmatprep.subr.mxu0 0.0
    %142 = vmatpush1.msra.mxu0 0.0
    %143 = vmatprep.subr.mxu0 0.0
    %144 = vmatpush1.msra.mxu0 0.0
    %145 = vmatprep.subr.mxu0 0.0
    %146 = vmatpush1.msra.mxu0 0.0
    %147 = vmatprep.subr.mxu0 0.0
    %148 = vmatpush1.msra.mxu0 0.0
    %149 = vmatprep.subr.mxu0 0.0
    %150 = vmatpush1.msra.mxu0 0.0
    %151 = vmatprep.subr.mxu0 0.0
    %152 = vmatpush1.msra.mxu0 %v115
    %153 = vmatprep.subr.mxu0 0.0
    %154 = vmatpush1.msra.mxu0 %v114
    %155 = vmatprep.subr.mxu0 0.0
    %156 = vmatpush1.msra.mxu0 %v113
    %157 = vmatprep.subr.mxu0 0.0
    %158 = vmatpush1.msra.mxu0 %v112
    %159 = vmatprep.subr.mxu0 0.0
    %160 = vmatpush2.msra.mxu0 0.0
    %161 = vmatprep.subr.mxu0 0.0
    %162 = vmatpush2.msra.mxu0 0.0
    %163 = vmatprep.subr.mxu0 0.0
    %164 = vmatpush2.msra.mxu0 0.0
    %165 = vmatprep.subr.mxu0 0.0
    %166 = vmatpush2.msra.mxu0 0.0
    %167 = vmatprep.subr.mxu0 0.0
    %168 = vmatpush2.msra.mxu0 0.0
    %169 = vmatprep.subr.mxu0 0.0
    %170 = vmatpush2.msra.mxu0 0.0
    %171 = vmatprep.subr.mxu0 0.0
    %172 = vmatpush2.msra.mxu0 0.0
    %173 = vmatprep.subr.mxu0 0.0
    %174 = vmatpush2.msra.mxu0 0.0
    %175 = vmatprep.subr.mxu0 0.0
    %176 = vmatpush2.msra.mxu0 0.0
    %177 = vmatprep.subr.mxu0 0.0
    %178 = vmatpush2.msra.mxu0 0.0
    %179 = vmatprep.subr.mxu0 0.0
    %180 = vmatpush2.msra.mxu0 0.0
    %181 = vmatprep.subr.mxu0 0.0
    %182 = vmatpush2.msra.mxu0 0.0
    %183 = vmatprep.subr.mxu0 0.0
    %184 = vmatpush2.msra.mxu0 0.0
    %185 = vmatprep.subr.mxu0 0.0
    %186 = vmatpush2.msra.mxu0 0.0
    %187 = vmatprep.subr.mxu0 0.0
    %188 = vmatpush2.msra.mxu0 0.0
    %189 = vmatprep.subr.mxu0 0.0
    %190 = vmatpush2.msra.mxu0 0.0
    %191 = vmatprep.mubr.f32.mxu0 0.0
    %192 = vmatmul.mubr.f32.gmra.mxu0 %v125
    %v193 = vpop.f32.mrf.mxu0
    %v194 = vadd.f32 %v121, %v193
    %v195 = vpop.f32.mrf.mxu0
    %196 = vdwg.mxu0
    %vm197 = vcmask 80896
    %198 = vst.msk [vmem:[#allocation2] sm:$0xff] %vm197, %v194
    // Predicated region
    $region22: #{graph_classification_forward.1} parent=1 // pred_check
      _
    $region23: #{graph_classification_forward.1} parent=1 // pred_check_branch
      %200 = sbr.rel (0) target = $region25
    $region24: #{graph_classification_forward.1} parent=1 // pred_region
      %s202 = ssub.s32 128, 128
      %203 = vsyncadd [#allocation3], %s202
      %s205 = sshll.u32 [#allocation2], 4
      %s206 = int_to_ptr.vmem [resolvable:$true] %s205
      %208 = dma.vmem_to_hbm [thread:$0]  %s206, 128, %s5, [#allocation3]
    $region25: #{graph_classification_forward.1} parent=1 // pred_fallthru
      _
    // Predicated region
    $region26: #{graph_classification_forward.1} parent=1 // pred_check
      _
    $region27: #{graph_classification_forward.1} parent=1 // pred_check_branch
      %210 = sbr.rel (0) target = $region29
    $region28: #{graph_classification_forward.1} parent=1 // pred_region
      %211 = dma.done [#allocation3], 128
    $region29: #{graph_classification_forward.1} parent=1 // pred_fallthru
      _
    %212 = vsyncpa [#allocation3], 1

</llo_original>
